<compile_context>
chip_gen: v5e
topology: v5e:2x2
jax: 0.10.0
libtpu: 0.0.40
codegen_flags: <defaults>
</compile_context>

<pallas_src>
import jax
import jax.numpy as jnp
from jax.experimental import pallas as pl
from jax.experimental.pallas import tpu as pltpu


def _head_kernel(b_ref, x_ref, w_ref, o_ref):
    """o_ref[(O, tb)] = w_ref[(O, D)] @ x_ref[(tb, D)]^T + bias (bias scalars in SMEM)."""
    y = jax.lax.dot_general(
        w_ref[...], x_ref[...],
        dimension_numbers=(((1,), (1,)), ((), ())),   # contract D of both -> (O, tb)
        preferred_element_type=jnp.float32,           # f32 accumulate
    )
    num_out = o_ref.shape[0]
    if num_out == 1:
        # Regression-head default (output_size == 1): single scalar bias broadcast.
        y = y + b_ref[0]
    else:
        # Small static O: per-row scalar broadcast from SMEM, unrolled at trace time.
        rows = jax.lax.broadcasted_iota(jnp.int32, y.shape, 0)
        for i in range(num_out):
            y = jnp.where(rows == i, y + b_ref[i], y)
    o_ref[...] = y.astype(o_ref.dtype)


def regression_head_forward(x, weight, bias, *, tile_b: int = 1024):
    """Pallas forward of BaseRegressionHead: returns x @ weight.T + bias, shape (B, O)."""
    B, D = x.shape
    O, D2 = weight.shape
    assert D == D2 and bias.shape == (O,)
    out_dtype = x.dtype
    smem_spec = pl.BlockSpec(memory_space=pltpu.MemorySpace.SMEM)

    if B <= tile_b:
        # Overhead-dominated regime: one kernel invocation, no grid machinery at all.
        out_t = pl.pallas_call(
            _head_kernel,
            out_shape=jax.ShapeDtypeStruct((O, B), out_dtype),
            in_specs=[
                smem_spec,                                          # bias -> SMEM
                pl.BlockSpec(memory_space=pltpu.MemorySpace.VMEM),  # x (whole array)
                pl.BlockSpec(memory_space=pltpu.MemorySpace.VMEM),  # weight (whole)
            ],
            out_specs=pl.BlockSpec(memory_space=pltpu.MemorySpace.VMEM),
        )(bias, x, weight)
        return out_t.T                                              # back to (B, O)

    # Scalable path: tile over B (the lane axis of the (O, B) output).
    nb = pl.cdiv(B, tile_b)
    b_pad = nb * tile_b
    if b_pad != B:
        x = jnp.pad(x, ((0, b_pad - B), (0, 0)))
    out_t = pl.pallas_call(
        _head_kernel,
        out_shape=jax.ShapeDtypeStruct((O, b_pad), out_dtype),
        grid=(nb,),
        in_specs=[
            smem_spec,                                        # bias resident in SMEM
            pl.BlockSpec((tile_b, D), lambda i: (i, 0)),      # stream x over B
            pl.BlockSpec((O, D), lambda i: (0, 0)),           # weight resident
        ],
        out_specs=pl.BlockSpec((O, tile_b), lambda i: (0, i)),  # lane-dense output
        compiler_params=pltpu.CompilerParams(
            dimension_semantics=("parallel",),                # shard B across TCs
        ),
    )(bias, x, weight)
    return out_t[:, :B].T                                     # drop pad, back to (B, O)


if __name__ == "__main__":
    key = jax.random.PRNGKey(0)
    batch = 2
    input_size = 32
    output_size = 1

    k_x, k_w, k_b, k_x2 = jax.random.split(key, 4)
    # Deterministic init mimicking PyTorch nn.Linear default:
    # uniform(-1/sqrt(in), 1/sqrt(in)) for both weight and bias.
    bound = 1.0 / (input_size ** 0.5)
    weight = jax.random.uniform(
        k_w, (output_size, input_size), jnp.float32, -bound, bound
    )
    bias = jax.random.uniform(k_b, (output_size,), jnp.float32, -bound, bound)
    x = jax.random.normal(k_x, (batch, input_size), jnp.float32)

    # Small-batch (grid-free) path.
    out = jax.block_until_ready(regression_head_forward(x, weight, bias))
    ref = x @ weight.T + bias
    assert out.shape == (batch, output_size)
    assert jnp.allclose(out, ref, atol=1e-5, rtol=1e-5)

    # Gridded path (tiled over B, ragged batch exercising the pad/slice logic).
    x_big = jax.random.normal(k_x2, (300, input_size), jnp.float32)
    out_big = jax.block_until_ready(
        regression_head_forward(x_big, weight, bias, tile_b=128)
    )
    ref_big = x_big @ weight.T + bias
    assert out_big.shape == (300, output_size)
    assert jnp.allclose(out_big, ref_big, atol=1e-4, rtol=1e-4)

    print("KERNEL_OK")
</pallas_src>

<mosaic_0001>
module attributes {stable_mosaic.version = 11 : i64} {
  func.func @_head_kernel(%arg0: memref<1xf32, #tpu.memory_space<smem>>, %arg1: memref<2x32xf32, #tpu.memory_space<vmem>>, %arg2: memref<1x32xf32, #tpu.memory_space<vmem>>, %arg3: memref<1x2xf32, #tpu.memory_space<vmem>>) attributes {dimension_semantics = [], scalar_prefetch = 0 : i64, scratch_operands = 0 : i64, tpu.core_type = #tpu.core_type<tc>} {
    %c0 = arith.constant 0 : index
    %c0_0 = arith.constant 0 : index
    %0 = vector.load %arg2[%c0, %c0_0] : memref<1x32xf32, #tpu.memory_space<vmem>>, vector<1x32xf32>
    %c0_1 = arith.constant 0 : index
    %c0_2 = arith.constant 0 : index
    %1 = vector.load %arg1[%c0_1, %c0_2] : memref<2x32xf32, #tpu.memory_space<vmem>>, vector<2x32xf32>
    %cst = arith.constant dense<0.000000e+00> : vector<1x2xf32>
    %2 = tpu.matmul %0, %1, %cst {dimension_numbers = #tpu.dot_dimension_numbers<[1], [1], [0], [0], [0, 0, 1, 0], [], []>} : vector<1x32xf32>, vector<2x32xf32>, vector<1x2xf32> -> vector<1x2xf32>
    %c0_3 = arith.constant 0 : index
    %3 = memref.load %arg0[%c0_3] : memref<1xf32, #tpu.memory_space<smem>>
    %4 = vector.broadcast %3 : f32 to vector<1x2xf32>
    %5 = arith.addf %2, %4 : vector<1x2xf32>
    %c0_4 = arith.constant 0 : index
    %c0_5 = arith.constant 0 : index
    %6 = vector.load %arg3[%c0_4, %c0_5] : memref<1x2xf32, #tpu.memory_space<vmem>>, vector<1x2xf32>
    tpu.vector_store %arg3[%c0_4, %c0_5], %5 {strides = array<i32>} : memref<1x2xf32, #tpu.memory_space<vmem>>, vector<1x2xf32>,
    return
  }
}

</mosaic_0001>

<llo_original>
// kernel: tpu_custom_call.1
$region0: #{tpu_custom_call.1}
  #allocation0 [shape = 'u32[]', space=smem, size = 0x4, offset = 0x4, fixed_abs, tag = 'smem constant byte address 0x4 - core index']
  #allocation1 [shape = 'u32[72,128]{1,0:T(1,128)}', space=vmem, size = 0x9000, scoped, tag = 'internal scratch']
  #allocation2 [shape = 'f32[1]{0:T(128)S(6)}', space=smem, size = 0x200, scoped, tag = 'scoped memory for tpu_custom_call.1']
  %s0 = inlined_call_operand.<no memory space> [shape: f32[1], index: 0, kind: input, shape index: {}]
  %s1 = inlined_call_operand.vmem [shape: f32[2,32], index: 1, kind: input, shape index: {}]
  %s2 = inlined_call_operand.hbm [shape: f32[1,32], index: 2, kind: input, shape index: {}]
  %s3 = inlined_call_operand.hbm [shape: f32[1,2], index: 3, kind: output, shape index: {}]
  %s4 = sld [smem:[#allocation0]]
  $region26: #{tpu_custom_call.1} parent=0
    _
  %s6 = ssub.s32 1, %s4
  %s7 = scalar_select 0, %s6, %s4
  %8 = sst [smem:[#allocation2]] %s0
  $region1: #{tpu_custom_call.1} parent=0
    #allocation3 [shape = 'u8[512]{0}', space=vmem, size = 0x400, scoped, tag = 'input window, operand 2, single buffered']
    #allocation4 [shape = 's32[1]{0}', space=sflag, size = 0x4, scoped, tag = 'scoped memory for tpu_custom_call.1']
    #allocation5 [shape = 's32[1]{0}', space=sflag, size = 0x4, scoped, tag = 'scoped memory for tpu_custom_call.1']
    #allocation6 [shape = 'u8[512]{0}', space=vmem, size = 0x400, scoped, tag = 'output window, operand 0, single buffered']
    %9 = vsyncpa [#allocation4], 0
    %10 = vsyncpa [#allocation5], 0
    // Predicated region
    $region2: #{tpu_custom_call.1} parent=1 // pred_check
      _
    $region3: #{tpu_custom_call.1} parent=1 // pred_check_branch
      %12 = sbr.rel (0) target = $region5
    $region4: #{tpu_custom_call.1} parent=1 // pred_region
      _
    $region5: #{tpu_custom_call.1} parent=1 // pred_fallthru
      _
    // Predicated region
    $region6: #{tpu_custom_call.1} parent=1 // pred_check
      _
    $region7: #{tpu_custom_call.1} parent=1 // pred_check_branch
      %14 = sbr.rel (0) target = $region9
    $region8: #{tpu_custom_call.1} parent=1 // pred_region
      _
    $region9: #{tpu_custom_call.1} parent=1 // pred_fallthru
      _
    // Predicated region
    $region10: #{tpu_custom_call.1} parent=1 // pred_check
      _
    $region11: #{tpu_custom_call.1} parent=1 // pred_check_branch
      %16 = sbr.rel (0) target = $region13
    $region12: #{tpu_custom_call.1} parent=1 // pred_region
      %18 = vsyncadd [#allocation4], 0
      %s20 = sshll.u32 %s2, 4
      %s21 = int_to_ptr.hbm [resolvable:$true] %s20
      %s22 = sshll.u32 [#allocation3], 4
      %s23 = int_to_ptr.vmem [resolvable:$true] %s22
      %25 = dma.hbm_to_vmem [thread:$0]  %s21, 16, %s23, [#allocation4]
    $region13: #{tpu_custom_call.1} parent=1 // pred_fallthru
      _
    // Predicated region
    $region14: #{tpu_custom_call.1} parent=1 // pred_check
      _
    $region15: #{tpu_custom_call.1} parent=1 // pred_check_branch
      %27 = sbr.rel (0) target = $region17
    $region16: #{tpu_custom_call.1} parent=1 // pred_region
      %29 = dma.done [#allocation4], 16
    $region17: #{tpu_custom_call.1} parent=1 // pred_fallthru
      _
    %v30 = vld [vmem:[#allocation3] sm:$0x1]
    %v31 = vld [vmem:[%s1] sm:$0x3]
    %s32 = sld [smem:[#allocation2]]
    %v33 = vstv %s32
    %vm34 = vcmask 261120
    %v36 = vsel %vm34, %v30, 0
    %v39 = vsel %vm34, %v31, 0
    %41 = vmatpush.xpose.msra.mxu0 0.0
    %42 = vmatpush.xpose.msra.mxu0 0.0
    %43 = vmatpush.xpose.msra.mxu0 0.0
    %44 = vmatpush.xpose.msra.mxu0 0.0
    %45 = vmatpush.xpose.msra.mxu0 0.0
    %46 = vmatpush.xpose.msra.mxu0 0.0
    %47 = vmatpush.xpose.msra.mxu0 0.0
    %48 = vmatpush.xpose.msra.mxu0 0.0
    %49 = vmatpush.xpose.msra.mxu0 0.0
    %50 = vmatpush.xpose.msra.mxu0 0.0
    %51 = vmatpush.xpose.msra.mxu0 0.0
    %52 = vmatpush.xpose.msra.mxu0 0.0
    %53 = vmatpush.xpose.msra.mxu0 0.0
    %54 = vmatpush.xpose.msra.mxu0 0.0
    %55 = vmatpush.xpose.msra.mxu0 0.0
    %56 = vmatpush.xpose.msra.mxu0 %v39
    %57 = vmatmul.f32.gmra.mxu0 %v36
    %v58 = vpop.f32.mrf.mxu0
    %v59 = vadd.f32 %v33, %v58
    %60 = vdwg.mxu0
    %vm61 = vcmask 8192
    %62 = vst.msk [vmem:[#allocation6] sm:$0x1] %vm61, %v59
    // Predicated region
    $region18: #{tpu_custom_call.1} parent=1 // pred_check
      _
    $region19: #{tpu_custom_call.1} parent=1 // pred_check_branch
      %64 = sbr.rel (0) target = $region21
    $region20: #{tpu_custom_call.1} parent=1 // pred_region
      %66 = vsyncadd [#allocation5], 0
      %s68 = sshll.u32 [#allocation6], 4
      %s69 = int_to_ptr.vmem [resolvable:$true] %s68
      %s70 = sshll.u32 %s3, 4
      %s71 = int_to_ptr.hbm [resolvable:$true] %s70
      %73 = dma.vmem_to_hbm [thread:$0]  %s69, 16, %s71, [#allocation5]
    $region21: #{tpu_custom_call.1} parent=1 // pred_fallthru
      _
    // Predicated region
    $region22: #{tpu_custom_call.1} parent=1 // pred_check
      _
    $region23: #{tpu_custom_call.1} parent=1 // pred_check_branch
      %75 = sbr.rel (0) target = $region25
    $region24: #{tpu_custom_call.1} parent=1 // pred_region
      %77 = dma.done [#allocation5], 16
    $region25: #{tpu_custom_call.1} parent=1 // pred_fallthru
      _
    %78 = vsyncpa [#allocation4], 1
    %79 = vsyncpa [#allocation5], 1

</llo_original>
